<compile_context>
chip_gen: v6e
topology: v6e:2x2x1
jax: 0.10.0
libtpu: 0.0.40
codegen_flags: <defaults>
</compile_context>

<pallas_src>
import functools

import jax
import jax.numpy as jnp
from jax.experimental import pallas as pl
from jax.experimental.pallas import tpu as pltpu


def _vq_kernel(esq_ref, embd_ref, embaug_ref, z_ref,
               zqT_ref, idx_ref, counts_ref, sse_ref,
               *, e_dim, tie_break):
    ti = pl.program_id(2)                              # inner T axis (reduction)

    z_in = z_ref[...]                                  # (tm, e_dim), native dtype
    tm = z_in.shape[0]
    embd = embd_ref[...]                               # (e_dim, n_e), distance dtype
    n_e = embd.shape[1]

    # ---- nearest-codebook search --------------------------------------------
    # argmin_k ||z - e_k||^2 == argmin_k (0.5*||e_k||^2 - z . e_k); the ||z||^2
    # row-constant is dropped from the score.
    ze = jnp.dot(z_in.astype(embd.dtype), embd,
                 preferred_element_type=jnp.float32)   # (tm, n_e) f32
    scores = esq_ref[...] - ze                         # (tm, n_e) f32
    min_s = jnp.min(scores, axis=1, keepdims=True)     # (tm, 1)

    if tie_break:
        # First-minimum semantics (matches torch.argmin on exact ties).
        iota = jax.lax.broadcasted_iota(jnp.int32, (tm, n_e), 1)
        masked = jnp.where(scores == min_s, iota, jnp.int32(n_e))
        idx_col = jnp.min(masked, axis=1, keepdims=True)
        onehot = (iota == idx_col).astype(jnp.float32)
    else:
        # Single compare; only valid when scores cannot tie within a row.
        onehot = (scores == min_s).astype(jnp.float32)

    # ---- fused z_q^T + index extraction: one f32 MXU pass --------------------
    # emb_aug rows [0, e_dim) hold emb^T, row e_dim holds an f32 iota
    # (0..n_e-1), remaining rows are zero padding to a sublane multiple.
    # Kept in f32 so the index row stays exact (n_e < 2^24) and z_q matches
    # the codebook bit-exactly.
    ext = jax.lax.dot_general(embaug_ref[...], onehot,
                              (((1,), (1,)), ((), ())),
                              preferred_element_type=jnp.float32)  # (e_dim_aug, tm)
    zqT_ref[...] = ext[0:e_dim, :].astype(zqT_ref.dtype)
    idx_ref[...] = jnp.round(ext[e_dim:e_dim + 1, :]).astype(jnp.int32)

    # ---- per-(batch, T-split) partial reductions -----------------------------
    @pl.when(ti == 0)
    def _init():
        counts_ref[...] = jnp.zeros_like(counts_ref)
        sse_ref[...] = jnp.zeros_like(sse_ref)

    counts_ref[...] += jnp.sum(onehot, axis=0, keepdims=True)          # (1, n_e)

    # sum ||z_q - z||^2 == sum ||z||^2 + 2 * sum min_k(0.5||e_k||^2 - z.e_k)
    zf = z_in.astype(jnp.float32)
    z_sq_row = jnp.sum(zf * zf, axis=1, keepdims=True)                 # (tm, 1)
    row_sse = jnp.maximum(z_sq_row + 2.0 * min_s, 0.0)
    sse_ref[...] += jnp.sum(row_sse, axis=0, keepdims=True)            # (1, 1)


def _small_vmem_tpu():
    """True when the local TPU has <= 64 MiB VMEM per core (v7x) or is unknown."""
    try:
        vmem = getattr(pltpu.get_tpu_info(), "vmem_capacity_bytes", None)
        if vmem is not None:
            return vmem <= (64 << 20)
    except Exception:
        pass
    return True   # conservative fallback


def _choose_block_t(T, target):
    """Largest T-tile <= target that keeps lane-dense, layout-friendly blocks."""
    if T <= target:
        return T
    best = None
    tm = 128
    while tm <= target:
        if T % tm == 0:
            best = tm
        tm += 128
    return best if best is not None else T


def vector_quantizer_forward(z, embedding, beta, *,
                             block_t=None,             # auto: 512 (v7x) / 1024 (v5e,v6e)
                             vmem_limit_bytes=None,    # auto: 40 MiB / 64 MiB
                             t_splits=1,               # >1: extra parallel T axis (v7x, B small)
                             distance_dtype=None,      # default: z.dtype (bf16 scores if z bf16)
                             zq_dtype=None,            # default: z.dtype
                             tie_break=True,
                             return_encodings=True):
    """Forward pass of the VQ-VAE VectorQuantizer.

    z: (B, T, e_dim); embedding: (n_e, e_dim).
    Returns (z_q [B, e_dim, T], loss,
             (perplexity, min_encodings [N, n_e] or None, min_encoding_indices [N, 1])).
    """
    B, T, e_dim = z.shape
    n_e = embedding.shape[0]
    N = B * T

    small_vmem = _small_vmem_tpu()
    if block_t is None:
        block_t = 512 if small_vmem else 1024
        if n_e >= 1024:                      # (tm, n_e) temporaries scale with both
            block_t = 256 if small_vmem else 512
    if vmem_limit_bytes is None:
        vmem_limit_bytes = (40 if small_vmem else 64) * 1024 * 1024

    if T % t_splits != 0:
        raise ValueError("T must be divisible by t_splits")
    T_eff = T // t_splits
    tm = _choose_block_t(T_eff, block_t)
    n_ti = T_eff // tm

    if distance_dtype is None:
        distance_dtype = z.dtype
    if zq_dtype is None:
        zq_dtype = z.dtype

    # Tiny one-time precomputes; all VMEM-resident across the entire grid.
    emb = embedding.astype(jnp.float32)
    embT = emb.T                                              # (e_dim, n_e)
    e_half_sq = 0.5 * jnp.sum(emb * emb, axis=1)[None, :]     # (1, n_e) f32
    e_dim_aug = ((e_dim + 1 + 7) // 8) * 8                    # codebook + iota row, 8-padded
    iota_row = jnp.arange(n_e, dtype=jnp.float32)[None, :]
    pad_rows = e_dim_aug - e_dim - 1
    parts = [embT, iota_row]
    if pad_rows:
        parts.append(jnp.zeros((pad_rows, n_e), jnp.float32))
    emb_aug = jnp.concatenate(parts, axis=0)                  # (e_dim_aug, n_e) f32
    embT_d = embT.astype(distance_dtype)                      # scores operand

    kernel = functools.partial(_vq_kernel, e_dim=e_dim, tie_break=tie_break)

    in_specs = [
        pl.BlockSpec((1, n_e), lambda b, to, ti: (0, 0)),            # 0.5*||e||^2
        pl.BlockSpec((e_dim, n_e), lambda b, to, ti: (0, 0)),        # emb^T (distance dtype)
        pl.BlockSpec((e_dim_aug, n_e), lambda b, to, ti: (0, 0)),    # emb^T + iota row (f32)
        pl.BlockSpec((None, tm, e_dim),
                     lambda b, to, ti: (b, to * n_ti + ti, 0)),      # z tile
    ]
    out_shapes = (
        jax.ShapeDtypeStruct((B, e_dim, T), zq_dtype),               # z_q^T (permute fused)
        jax.ShapeDtypeStruct((B, 1, T), jnp.int32),                  # indices (lane-dense)
        jax.ShapeDtypeStruct((B, t_splits, 1, n_e), jnp.float32),    # partial histograms
        jax.ShapeDtypeStruct((B, t_splits, 1, 1), jnp.float32),      # partial sq. error sums
    )
    out_specs = (
        pl.BlockSpec((None, e_dim, tm), lambda b, to, ti: (b, 0, to * n_ti + ti)),
        pl.BlockSpec((None, 1, tm), lambda b, to, ti: (b, 0, to * n_ti + ti)),
        pl.BlockSpec((None, None, 1, n_e), lambda b, to, ti: (b, to, 0, 0)),
        pl.BlockSpec((None, None, 1, 1), lambda b, to, ti: (b, to, 0, 0)),
    )

    cost = pl.CostEstimate(
        flops=2 * N * n_e * (e_dim + e_dim_aug),
        transcendentals=0,
        bytes_accessed=(int(z.size) * z.dtype.itemsize
                        + B * e_dim * T * jnp.dtype(zq_dtype).itemsize
                        + N * 4
                        + B * t_splits * (n_e + 1) * 4
                        + (e_dim + e_dim_aug + 1) * n_e * 4),
    )

    zqT, idx, counts, sse = pl.pallas_call(
        kernel,
        grid=(B, t_splits, n_ti),
        in_specs=in_specs,
        out_specs=out_specs,
        out_shape=out_shapes,
        compiler_params=pltpu.CompilerParams(
            # Batch and T-outer axes shard across TensorCores (v7x megacore);
            # the inner T axis carries the counts/loss accumulators.
            dimension_semantics=("parallel", "parallel", "arbitrary"),
            vmem_limit_bytes=vmem_limit_bytes,
        ),
        cost_estimate=cost,
    )(e_half_sq, embT_d, emb_aug, z)

    min_encoding_indices = idx.reshape(N, 1)
    # One-hot encodings are never written by the kernel (saves the dominant
    # HBM write); reconstruct them only if the caller needs them.
    min_encodings = (jax.nn.one_hot(idx.reshape(-1), n_e, dtype=z.dtype)
                     if return_encodings else None)

    # Tiny wrapper-side finalization (one (n_e,) pass + a handful of scalars).
    loss = (1.0 + beta) * jnp.sum(sse) / jnp.float32(N * e_dim)
    e_mean = jnp.sum(counts, axis=(0, 1, 2)) / jnp.float32(N)
    perplexity = jnp.exp(-jnp.sum(e_mean * jnp.log(e_mean + 1e-10)))

    # TODO(synk): forward value only — the straight-through estimator
    # (z + (z_q - z).detach()) and the stop_gradient split of the loss need a
    # custom_vjp if this kernel is used for training.
    return zqT, loss, (perplexity, min_encodings, min_encoding_indices)


def _reference_forward(z, embedding, beta):
    n_e, e_dim = embedding.shape
    zf = z.reshape(-1, e_dim)
    d = (jnp.sum(zf ** 2, axis=1, keepdims=True)
         + jnp.sum(embedding ** 2, axis=1)
         - 2.0 * zf @ embedding.T)
    idx = jnp.argmin(d, axis=1)
    onehot = jax.nn.one_hot(idx, n_e, dtype=jnp.float32)
    z_q = (onehot @ embedding).reshape(z.shape)
    loss = (beta + 1.0) * jnp.mean((z_q - z) ** 2)
    e_mean = jnp.mean(onehot, axis=0)
    ppl = jnp.exp(-jnp.sum(e_mean * jnp.log(e_mean + 1e-10)))
    return z_q.transpose(0, 2, 1), loss, (ppl, onehot, idx[:, None])


if __name__ == "__main__":
    # Module hyperparameters (small deterministic test shapes).
    n_e, e_dim, beta = 128, 32, 0.25
    B, T = 2, 8

    key = jax.random.PRNGKey(0)
    k_emb, k_z, k_z2 = jax.random.split(key, 3)

    # nn.Embedding(n_e, e_dim).weight ~ U(-1/n_e, 1/n_e).
    embedding = jax.random.uniform(k_emb, (n_e, e_dim), jnp.float32,
                                   minval=-1.0 / n_e, maxval=1.0 / n_e)
    z = jax.random.normal(k_z, (B, T, e_dim), jnp.float32)

    z_q, loss, (ppl, onehot, idx) = vector_quantizer_forward(z, embedding, beta)
    jax.block_until_ready((z_q, loss, ppl, onehot, idx))

    z_q_r, loss_r, (ppl_r, onehot_r, idx_r) = _reference_forward(z, embedding, beta)
    assert z_q.shape == (B, e_dim, T)
    assert onehot.shape == (B * T, n_e)
    assert idx.shape == (B * T, 1)
    assert jnp.allclose(z_q, z_q_r, atol=1e-5)
    assert jnp.allclose(loss, loss_r, rtol=1e-4, atol=1e-6)
    assert jnp.allclose(ppl, ppl_r, rtol=1e-4, atol=1e-4)
    assert jnp.array_equal(onehot.astype(jnp.float32), onehot_r)
    assert jnp.array_equal(idx, idx_r.astype(jnp.int32))

    # Second case: B=1 with a parallel T-outer split (keeps both v7x cores busy).
    z1 = jax.random.normal(k_z2, (1, 256, e_dim), jnp.float32)
    z_q1, loss1, (ppl1, onehot1, idx1) = vector_quantizer_forward(
        z1, embedding, beta, t_splits=2)
    jax.block_until_ready((z_q1, loss1, ppl1, onehot1, idx1))

    z_q1_r, loss1_r, (ppl1_r, onehot1_r, idx1_r) = _reference_forward(z1, embedding, beta)
    assert z_q1.shape == (1, e_dim, 256)
    assert jnp.allclose(z_q1, z_q1_r, atol=1e-5)
    assert jnp.allclose(loss1, loss1_r, rtol=1e-4, atol=1e-6)
    assert jnp.allclose(ppl1, ppl1_r, rtol=1e-4, atol=1e-4)
    assert jnp.array_equal(idx1, idx1_r.astype(jnp.int32))
    assert jnp.array_equal(onehot1.astype(jnp.float32), onehot1_r)

    print("KERNEL_OK")
</pallas_src>

<mosaic_0001>
module attributes {stable_mosaic.version = 11 : i64} {
  func.func @_vq_kernel(%arg0: i32, %arg1: i32, %arg2: i32, %arg3: memref<1x128xf32, #tpu.memory_space<vmem>>, %arg4: memref<32x128xf32, #tpu.memory_space<vmem>>, %arg5: memref<40x128xf32, #tpu.memory_space<vmem>>, %arg6: memref<1x8x32xf32, #tpu.memory_space<vmem>>, %arg7: memref<1x32x8xf32, #tpu.memory_space<vmem>>, %arg8: memref<1x1x8xi32, #tpu.memory_space<vmem>>, %arg9: memref<1x1x1x128xf32, #tpu.memory_space<vmem>>, %arg10: memref<1x1x1x1xf32, #tpu.memory_space<vmem>>) attributes {dimension_semantics = [#tpu.dimension_semantics<parallel>, #tpu.dimension_semantics<parallel>, #tpu.dimension_semantics<arbitrary>], iteration_bounds = array<i64: 2, 1, 1>, scalar_prefetch = 0 : i64, scratch_operands = 0 : i64, tpu.core_type = #tpu.core_type<tc>, window_params = [{pipeline_mode = #tpu.pipeline_mode<synchronous>, transform_indices = @transform_0, window_bounds = array<i64: 1, 128>}, {pipeline_mode = #tpu.pipeline_mode<synchronous>, transform_indices = @transform_1, window_bounds = array<i64: 32, 128>}, {pipeline_mode = #tpu.pipeline_mode<synchronous>, transform_indices = @transform_2, window_bounds = array<i64: 40, 128>}, {transform_indices = @transform_3, window_bounds = array<i64: 1, 8, 32>}, {transform_indices = @transform_4, window_bounds = array<i64: 1, 32, 8>}, {transform_indices = @transform_5, window_bounds = array<i64: 1, 1, 8>}, {transform_indices = @transform_6, window_bounds = array<i64: 1, 1, 1, 128>}, {transform_indices = @transform_7, window_bounds = array<i64: 1, 1, 1, 1>}]} {
    %c0 = arith.constant 0 : index
    %c0_0 = arith.constant 0 : index
    %c0_1 = arith.constant 0 : index
    %0 = vector.load %arg6[%c0, %c0_0, %c0_1] : memref<1x8x32xf32, #tpu.memory_space<vmem>>, vector<1x8x32xf32>
    %1 = vector.shape_cast %0 : vector<1x8x32xf32> to vector<8x32xf32>
    %c0_2 = arith.constant 0 : index
    %c0_3 = arith.constant 0 : index
    %2 = vector.load %arg4[%c0_2, %c0_3] : memref<32x128xf32, #tpu.memory_space<vmem>>, vector<32x128xf32>
    %cst = arith.constant dense<0.000000e+00> : vector<8x128xf32>
    %3 = tpu.matmul %1, %2, %cst {dimension_numbers = #tpu.dot_dimension_numbers<[1], [0], [0], [1], [0, 0, 1, 1], [], []>} : vector<8x32xf32>, vector<32x128xf32>, vector<8x128xf32> -> vector<8x128xf32>
    %c0_4 = arith.constant 0 : index
    %c0_5 = arith.constant 0 : index
    %4 = vector.load %arg3[%c0_4, %c0_5] : memref<1x128xf32, #tpu.memory_space<vmem>>, vector<1x128xf32>
    %5 = vector.broadcast %4 : vector<1x128xf32> to vector<8x128xf32>
    %6 = arith.subf %5, %3 : vector<8x128xf32>
    %cst_6 = arith.constant dense<0x7F800000> : vector<8xf32>
    %7 = vector.multi_reduction <minimumf>, %6, %cst_6 [1] : vector<8x128xf32> to vector<8xf32>
    %8 = vector.shape_cast %7 : vector<8xf32> to vector<8x1xf32>
    %9 = tpu.iota {dimensions = array<i32: 1>} : vector<8x128xi32>
    %10 = vector.broadcast %8 : vector<8x1xf32> to vector<8x128xf32>
    %11 = arith.cmpf oeq, %6, %10 : vector<8x128xf32>
    %c128_i32 = arith.constant 128 : i32
    %12 = vector.broadcast %c128_i32 : i32 to vector<8x128xi32>
    %13 = arith.select %11, %9, %12 : vector<8x128xi1>, vector<8x128xi32>
    %cst_7 = arith.constant dense<2147483647> : vector<8xi32>
    %14 = vector.multi_reduction <minsi>, %13, %cst_7 [1] : vector<8x128xi32> to vector<8xi32>
    %15 = vector.shape_cast %14 : vector<8xi32> to vector<8x1xi32>
    %16 = vector.broadcast %15 : vector<8x1xi32> to vector<8x128xi32>
    %17 = arith.cmpi eq, %9, %16 : vector<8x128xi32>
    %18 = arith.extui %17 : vector<8x128xi1> to vector<8x128xi32>
    %19 = arith.sitofp %18 : vector<8x128xi32> to vector<8x128xf32>
    %c0_8 = arith.constant 0 : index
    %c0_9 = arith.constant 0 : index
    %20 = vector.load %arg5[%c0_8, %c0_9] : memref<40x128xf32, #tpu.memory_space<vmem>>, vector<40x128xf32>
    %cst_10 = arith.constant dense<0.000000e+00> : vector<40x8xf32>
    %21 = tpu.matmul %20, %19, %cst_10 {dimension_numbers = #tpu.dot_dimension_numbers<[1], [1], [0], [0], [0, 0, 1, 0], [], []>} : vector<40x128xf32>, vector<8x128xf32>, vector<40x8xf32> -> vector<40x8xf32>
    %22 = vector.extract_strided_slice %21 {offsets = [0, 0], sizes = [32, 8], strides = [1, 1]} : vector<40x8xf32> to vector<32x8xf32>
    %c0_11 = arith.constant 0 : index
    %c0_12 = arith.constant 0 : index
    %c0_13 = arith.constant 0 : index
    %23 = vector.load %arg7[%c0_11, %c0_12, %c0_13] : memref<1x32x8xf32, #tpu.memory_space<vmem>>, vector<1x32x8xf32>
    %24 = vector.shape_cast %23 : vector<1x32x8xf32> to vector<32x8xf32>
    %25 = vector.shape_cast %22 : vector<32x8xf32> to vector<1x32x8xf32>
    tpu.vector_store %arg7[%c0_11, %c0_12, %c0_13], %25 {strides = array<i32>} : memref<1x32x8xf32, #tpu.memory_space<vmem>>, vector<1x32x8xf32>,
    %26 = vector.extract_strided_slice %21 {offsets = [32, 0], sizes = [1, 8], strides = [1, 1]} : vector<40x8xf32> to vector<1x8xf32>
    %27 = math.roundeven %26 : vector<1x8xf32>
    %28 = arith.fptosi %27 : vector<1x8xf32> to vector<1x8xi32>
    %c0_14 = arith.constant 0 : index
    %c0_15 = arith.constant 0 : index
    %c0_16 = arith.constant 0 : index
    %29 = vector.load %arg8[%c0_14, %c0_15, %c0_16] : memref<1x1x8xi32, #tpu.memory_space<vmem>>, vector<1x1x8xi32>
    %30 = vector.shape_cast %29 : vector<1x1x8xi32> to vector<1x8xi32>
    %31 = vector.shape_cast %28 : vector<1x8xi32> to vector<1x1x8xi32>
    tpu.vector_store %arg8[%c0_14, %c0_15, %c0_16], %31 {strides = array<i32>} : memref<1x1x8xi32, #tpu.memory_space<vmem>>, vector<1x1x8xi32>,
    %c0_i32 = arith.constant 0 : i32
    %32 = arith.cmpi eq, %arg2, %c0_i32 : i32
    %33 = arith.extui %32 : i1 to i32
    %c0_i32_17 = arith.constant 0 : i32
    %34 = arith.cmpi ne, %33, %c0_i32_17 : i32
    scf.if %34 {
      %cst_39 = arith.constant 0.000000e+00 : f32
      %59 = vector.broadcast %cst_39 : f32 to vector<1x128xf32>
      %c0_40 = arith.constant 0 : index
      %c0_41 = arith.constant 0 : index
      %c0_42 = arith.constant 0 : index
      %c0_43 = arith.constant 0 : index
      %60 = vector.load %arg9[%c0_40, %c0_41, %c0_42, %c0_43] : memref<1x1x1x128xf32, #tpu.memory_space<vmem>>, vector<1x1x1x128xf32>
      %61 = vector.shape_cast %60 : vector<1x1x1x128xf32> to vector<1x128xf32>
      %62 = vector.shape_cast %59 : vector<1x128xf32> to vector<1x1x1x128xf32>
      tpu.vector_store %arg9[%c0_40, %c0_41, %c0_42, %c0_43], %62 {strides = array<i32>} : memref<1x1x1x128xf32, #tpu.memory_space<vmem>>, vector<1x1x1x128xf32>,
      %cst_44 = arith.constant 0.000000e+00 : f32
      %63 = vector.broadcast %cst_44 : f32 to vector<1x1xf32>
      %c0_45 = arith.constant 0 : index
      %c0_46 = arith.constant 0 : index
      %c0_47 = arith.constant 0 : index
      %c0_48 = arith.constant 0 : index
      %64 = vector.load %arg10[%c0_45, %c0_46, %c0_47, %c0_48] : memref<1x1x1x1xf32, #tpu.memory_space<vmem>>, vector<1x1x1x1xf32>
      %65 = vector.shape_cast %64 : vector<1x1x1x1xf32> to vector<1x1xf32>
      %66 = vector.shape_cast %63 : vector<1x1xf32> to vector<1x1x1x1xf32>
      tpu.vector_store %arg10[%c0_45, %c0_46, %c0_47, %c0_48], %66 {strides = array<i32>} : memref<1x1x1x1xf32, #tpu.memory_space<vmem>>, vector<1x1x1x1xf32>,
    } else {
    }
    %c0_18 = arith.constant 0 : index
    %c0_19 = arith.constant 0 : index
    %c0_20 = arith.constant 0 : index
    %c0_21 = arith.constant 0 : index
    %35 = vector.load %arg9[%c0_18, %c0_19, %c0_20, %c0_21] : memref<1x1x1x128xf32, #tpu.memory_space<vmem>>, vector<1x1x1x128xf32>
    %36 = vector.shape_cast %35 : vector<1x1x1x128xf32> to vector<1x128xf32>
    %cst_22 = arith.constant dense<0.000000e+00> : vector<128xf32>
    %37 = vector.multi_reduction <add>, %19, %cst_22 [0] : vector<8x128xf32> to vector<128xf32>
    %38 = vector.shape_cast %37 : vector<128xf32> to vector<1x128xf32>
    %39 = arith.addf %36, %38 : vector<1x128xf32>
    %c0_23 = arith.constant 0 : index
    %c0_24 = arith.constant 0 : index
    %c0_25 = arith.constant 0 : index
    %c0_26 = arith.constant 0 : index
    %40 = vector.load %arg9[%c0_23, %c0_24, %c0_25, %c0_26] : memref<1x1x1x128xf32, #tpu.memory_space<vmem>>, vector<1x1x1x128xf32>
    %41 = vector.shape_cast %40 : vector<1x1x1x128xf32> to vector<1x128xf32>
    %42 = vector.shape_cast %39 : vector<1x128xf32> to vector<1x1x1x128xf32>
    tpu.vector_store %arg9[%c0_23, %c0_24, %c0_25, %c0_26], %42 {strides = array<i32>} : memref<1x1x1x128xf32, #tpu.memory_space<vmem>>, vector<1x1x1x128xf32>,
    %43 = arith.mulf %1, %1 : vector<8x32xf32>
    %cst_27 = arith.constant dense<0.000000e+00> : vector<8xf32>
    %44 = vector.multi_reduction <add>, %43, %cst_27 [1] : vector<8x32xf32> to vector<8xf32>
    %45 = vector.shape_cast %44 : vector<8xf32> to vector<8x1xf32>
    %cst_28 = arith.constant 2.000000e+00 : f32
    %46 = vector.broadcast %cst_28 : f32 to vector<8x1xf32>
    %47 = arith.mulf %46, %8 : vector<8x1xf32>
    %48 = arith.addf %45, %47 : vector<8x1xf32>
    %cst_29 = arith.constant 0.000000e+00 : f32
    %49 = vector.broadcast %cst_29 : f32 to vector<8x1xf32>
    %50 = arith.maximumf %48, %49 : vector<8x1xf32>
    %c0_30 = arith.constant 0 : index
    %c0_31 = arith.constant 0 : index
    %c0_32 = arith.constant 0 : index
    %c0_33 = arith.constant 0 : index
    %51 = vector.load %arg10[%c0_30, %c0_31, %c0_32, %c0_33] : memref<1x1x1x1xf32, #tpu.memory_space<vmem>>, vector<1x1x1x1xf32>
    %52 = vector.shape_cast %51 : vector<1x1x1x1xf32> to vector<1x1xf32>
    %cst_34 = arith.constant dense<0.000000e+00> : vector<1xf32>
    %53 = vector.multi_reduction <add>, %50, %cst_34 [0] : vector<8x1xf32> to vector<1xf32>
    %54 = vector.shape_cast %53 : vector<1xf32> to vector<1x1xf32>
    %55 = arith.addf %52, %54 : vector<1x1xf32>
    %c0_35 = arith.constant 0 : index
    %c0_36 = arith.constant 0 : index
    %c0_37 = arith.constant 0 : index
    %c0_38 = arith.constant 0 : index
    %56 = vector.load %arg10[%c0_35, %c0_36, %c0_37, %c0_38] : memref<1x1x1x1xf32, #tpu.memory_space<vmem>>, vector<1x1x1x1xf32>
    %57 = vector.shape_cast %56 : vector<1x1x1x1xf32> to vector<1x1xf32>
    %58 = vector.shape_cast %55 : vector<1x1xf32> to vector<1x1x1x1xf32>
    tpu.vector_store %arg10[%c0_35, %c0_36, %c0_37, %c0_38], %58 {strides = array<i32>} : memref<1x1x1x1xf32, #tpu.memory_space<vmem>>, vector<1x1x1x1xf32>,
    return
  }
  func.func @transform_0(%arg0: i32, %arg1: i32, %arg2: i32) -> (i32, i32) {
    %c0_i32 = arith.constant 0 : i32
    %c0_i32_0 = arith.constant 0 : i32
    %c0_i32_1 = arith.constant 0 : i32
    return %c0_i32, %c0_i32_0 : i32, i32
  }
  func.func @transform_1(%arg0: i32, %arg1: i32, %arg2: i32) -> (i32, i32) {
    %c0_i32 = arith.constant 0 : i32
    %c0_i32_0 = arith.constant 0 : i32
    %c0_i32_1 = arith.constant 0 : i32
    return %c0_i32, %c0_i32_0 : i32, i32
  }
  func.func @transform_2(%arg0: i32, %arg1: i32, %arg2: i32) -> (i32, i32) {
    %c0_i32 = arith.constant 0 : i32
    %c0_i32_0 = arith.constant 0 : i32
    %c0_i32_1 = arith.constant 0 : i32
    return %c0_i32, %c0_i32_0 : i32, i32
  }
  func.func @transform_3(%arg0: i32, %arg1: i32, %arg2: i32) -> (i32, i32, i32) {
    %c1_i32 = arith.constant 1 : i32
    %0 = arith.muli %arg1, %c1_i32 : i32
    %1 = arith.addi %0, %arg2 : i32
    %c0_i32 = arith.constant 0 : i32
    %c0_i32_0 = arith.constant 0 : i32
    return %arg0, %1, %c0_i32 : i32, i32, i32
  }
  func.func @transform_4(%arg0: i32, %arg1: i32, %arg2: i32) -> (i32, i32, i32) {
    %c1_i32 = arith.constant 1 : i32
    %0 = arith.muli %arg1, %c1_i32 : i32
    %1 = arith.addi %0, %arg2 : i32
    %c0_i32 = arith.constant 0 : i32
    %c0_i32_0 = arith.constant 0 : i32
    return %arg0, %c0_i32, %1 : i32, i32, i32
  }
  func.func @transform_5(%arg0: i32, %arg1: i32, %arg2: i32) -> (i32, i32, i32) {
    %c1_i32 = arith.constant 1 : i32
    %0 = arith.muli %arg1, %c1_i32 : i32
    %1 = arith.addi %0, %arg2 : i32
    %c0_i32 = arith.constant 0 : i32
    %c0_i32_0 = arith.constant 0 : i32
    return %arg0, %c0_i32, %1 : i32, i32, i32
  }
  func.func @transform_6(%arg0: i32, %arg1: i32, %arg2: i32) -> (i32, i32, i32, i32) {
    %c0_i32 = arith.constant 0 : i32
    %c0_i32_0 = arith.constant 0 : i32
    %c0_i32_1 = arith.constant 0 : i32
    return %arg0, %arg1, %c0_i32, %c0_i32_0 : i32, i32, i32, i32
  }
  func.func @transform_7(%arg0: i32, %arg1: i32, %arg2: i32) -> (i32, i32, i32, i32) {
    %c0_i32 = arith.constant 0 : i32
    %c0_i32_0 = arith.constant 0 : i32
    %c0_i32_1 = arith.constant 0 : i32
    return %arg0, %arg1, %c0_i32, %c0_i32_0 : i32, i32, i32, i32
  }
}

</mosaic_0001>

<llo_original>
// kernel: tpu_custom_call.1
$region0: #{tpu_custom_call.1}
  #allocation0 [shape = 'u32[]', space=smem, size = 0x4, offset = 0x4, fixed_abs, tag = 'smem constant byte address 0x4 - core index']
  #allocation1 [shape = 'u32[144,128]{1,0:T(1,128)}', space=vmem, size = 0x12000, scoped, tag = 'internal scratch']
  %s0 = inlined_call_operand.hbm [shape: f32[1,128], index: 0, kind: input, shape index: {}]
  %s1 = inlined_call_operand.hbm [shape: f32[32,128], index: 1, kind: input, shape index: {}]
  %s2 = inlined_call_operand.hbm [shape: f32[40,128], index: 2, kind: input, shape index: {}]
  %s3 = inlined_call_operand.hbm [shape: f32[2,8,32], index: 3, kind: input, shape index: {}]
  %s4 = inlined_call_operand.vmem [shape: f32[2,32,8], index: 4, kind: output, shape index: {0}]
  %s5 = inlined_call_operand.hbm [shape: s32[2,1,8], index: 5, kind: output, shape index: {1}]
  %s6 = inlined_call_operand.hbm [shape: f32[2,1,1,128], index: 6, kind: output, shape index: {2}]
  %s7 = inlined_call_operand.vmem [shape: f32[2,1,1,1], index: 7, kind: output, shape index: {3}]
  %8 = xla_tuple %s4, %s5, %s6, %s7
  %s9 = sld [smem:[#allocation0]]
  $region93: #{tpu_custom_call.1} parent=0
    _
  %s11 = ssub.s32 1, %s9
  %s12 = scalar_select 0, %s11, %s9
  $region1: #{tpu_custom_call.1} parent=0
    #allocation2 [shape = 'u8[512]{0}', space=vmem, size = 0x400, scoped, tag = 'input window, operand 0, single buffered']
    #allocation3 [shape = 's32[2]{0}', space=sflag, size = 0x8, scoped, tag = 'scoped memory for tpu_custom_call.1']
    #allocation4 [shape = 's32[2]{0}', space=sflag, size = 0x8, scoped, tag = 'scoped memory for tpu_custom_call.1']
    #allocation5 [shape = 'u8[16384]{0}', space=vmem, size = 0x4000, scoped, tag = 'input window, operand 1, single buffered']
    #allocation6 [shape = 's32[1]{0}', space=sflag, size = 0x4, scoped, tag = 'scoped memory for tpu_custom_call.1']
    #allocation7 [shape = 'u8[20480]{0}', space=vmem, size = 0x5000, scoped, tag = 'input window, operand 2, single buffered']
    #allocation8 [shape = 'u8[8192]{0}', space=vmem, size = 0x2000, scoped, tag = 'input window, operand 3']
    #allocation9 [shape = 's32[2]{0}', space=sflag, size = 0x8, scoped, tag = 'scoped memory for tpu_custom_call.1']
    #allocation10 [shape = 'u8[1024]{0}', space=vmem, size = 0x400, scoped, tag = 'output window, operand 1']
    #allocation11 [shape = 'u8[1024]{0}', space=vmem, size = 0x400, scoped, tag = 'output window, operand 2']
    #allocation12 [shape = 's32[2]{0}', space=sflag, size = 0x8, scoped, tag = 'scoped memory for tpu_custom_call.1']
    %13 = vsyncpa [#allocation3], 0
    %14 = vsyncpa [#allocation6], 0
    %15 = vsyncpa [#allocation9], 0
    %s16 = scalar_lea.sflag [#allocation9], 1
    %17 = vsyncpa %s16, 0
    %18 = vsyncpa [#allocation4], 0
    %s19 = scalar_lea.sflag [#allocation4], 1
    %20 = vsyncpa %s19, 0
    %21 = vsyncpa [#allocation12], 0
    %s22 = scalar_lea.sflag [#allocation12], 1
    %23 = vsyncpa %s22, 0
    loop: start=0, step=1, limit=4
    $region2: #{tpu_custom_call.1} parent=1 // loop_pre_header
      _
    $region3: #{tpu_custom_call.1} parent=1 // loop_header
      %s25 = sphi 0, %s29
      %p26 = scmp.ge.s32.totalorder %s25, 4
      %s32 = sphi 0, %s51
      %s33 = sphi 0, %s47
      %s34 = sphi 0, %s43
      %s35 = sphi 0, %s32
      %s36 = sphi 0, %s33
      %s37 = sphi 0, %s34
      %s38 = sphi 0, %s35
      %s39 = sphi 0, %s36
      %s40 = sphi 0, %s37
      %s52 = sphi 0, %s52
      %s54 = sphi 0, %s52
      %s55 = sphi 0, %s54
      %s69 = sphi 0, %s55
      %s73 = sphi 0, %s73
      %s75 = sphi 0, %s73
      %s76 = sphi 0, %s75
      %s90 = sphi 0, %s76
      %s94 = sphi 0, %s94
      %s96 = sphi 0, %s94
      %s97 = sphi 0, %s96
      %s111 = sphi 0, %s97
      %s121 = sphi 0, %s123
      %s124 = sphi 0, %s121
      %s125 = sphi 0, %s124
      %s141 = sphi 0, %s125
      %s151 = sphi 0, %s153
      %s154 = sphi 0, %s151
      %s155 = sphi 0, %s154
      %s171 = sphi 0, %s155
      %s181 = sphi 0, %s183
      %s184 = sphi 0, %s181
      %s185 = sphi 0, %s184
      %s201 = sphi 0, %s185
      %s209 = sphi 0, %s211
      %s212 = sphi 0, %s209
      %s213 = sphi 0, %s212
      %s229 = sphi 0, %s213
      %s237 = sphi 0, %s239
      %s240 = sphi 0, %s237
      %s241 = sphi 0, %s240
      %s257 = sphi 0, %s241
    $region4: #{tpu_custom_call.1} parent=1 // loop_header_branch
      %28 = sbr.rel (%p26) target = $region8
    $region5: #{tpu_custom_call.1} parent=1 // loop_body
      %s30 = ssub.s32 %s25, 1
      %s31 = ssub.s32 %s25, 2
      %s41 = sadd.s32 1, %s34
      %p42 = scmp.ge.s32.totalorder %s41, 1
      %s43 = scalar_select %p42, 0, %s41
      %s44 = sadd.s32 1, %s33
      %s45 = scalar_select %p42, %s44, %s33
      %p46 = scmp.ge.s32.totalorder %s45, 1
      %s47 = scalar_select %p46, 0, %s45
      %s48 = sadd.s32 1, %s32
      %s49 = scalar_select %p46, %s48, %s32
      %p50 = scmp.ge.s32.totalorder %s49, 2
      %s51 = scalar_select %p50, 0, %s49
      %s53 = sadd.s32 %s52, 1
      %p56 = scmp.eq.s32.totalorder %s25, 1
      %p57 = scmp.ne.s32.totalorder %s52, %s54
      %p58 = scmp.eq.s32.totalorder %s25, 0
      %p59 = por %p57, %p58
      %p60 = scmp.ne.s32.totalorder %s52, %s54
      %p61 = scmp.eq.s32.totalorder %s30, 1
      %p62 = por %p60, %p61
      %p63 = scmp.ne.s32.totalorder %s54, %s55
      %p64 = scmp.eq.s32.totalorder %s30, 0
      %p65 = por %p63, %p64
      %p66 = scmp.ne.s32.totalorder %s54, %s55
      %p67 = scmp.eq.s32.totalorder %s31, 1
      %p68 = por %p66, %p67
      %p70 = scmp.ne.s32.totalorder %s55, %s69
      %p71 = scmp.eq.s32.totalorder %s31, 0
      %p72 = por %p70, %p71
      %s74 = sadd.s32 %s73, 1
      %p77 = scmp.eq.s32.totalorder %s25, 1
      %p78 = scmp.ne.s32.totalorder %s73, %s75
      %p79 = scmp.eq.s32.totalorder %s25, 0
      %p80 = por %p78, %p79
      %p81 = scmp.ne.s32.totalorder %s73, %s75
      %p82 = scmp.eq.s32.totalorder %s30, 1
      %p83 = por %p81, %p82
      %p84 = scmp.ne.s32.totalorder %s75, %s76
      %p85 = scmp.eq.s32.totalorder %s30, 0
      %p86 = por %p84, %p85
      %p87 = scmp.ne.s32.totalorder %s75, %s76
      %p88 = scmp.eq.s32.totalorder %s31, 1
      %p89 = por %p87, %p88
      %p91 = scmp.ne.s32.totalorder %s76, %s90
      %p92 = scmp.eq.s32.totalorder %s31, 0
      %p93 = por %p91, %p92
      %s95 = sadd.s32 %s94, 1
      %p98 = scmp.eq.s32.totalorder %s25, 1
      %p99 = scmp.ne.s32.totalorder %s94, %s96
      %p100 = scmp.eq.s32.totalorder %s25, 0
      %p101 = por %p99, %p100
      %p102 = scmp.ne.s32.totalorder %s94, %s96
      %p103 = scmp.eq.s32.totalorder %s30, 1
      %p104 = por %p102, %p103
      %p105 = scmp.ne.s32.totalorder %s96, %s97
      %p106 = scmp.eq.s32.totalorder %s30, 0
      %p107 = por %p105, %p106
      %p108 = scmp.ne.s32.totalorder %s96, %s97
      %p109 = scmp.eq.s32.totalorder %s31, 1
      %p110 = por %p108, %p109
      %p112 = scmp.ne.s32.totalorder %s97, %s111
      %p113 = scmp.eq.s32.totalorder %s31, 0
      %p114 = por %p112, %p113
      %s115 = sadd.s32 %s33, %s34
      %s116 = sadd.s32 %s47, %s43
      %s117 = ssub.s32 %s32, %s51
      %s118 = ssub.s32 %s115, %s116
      %s119 = sor.u32 %s117, %s118
      %p120 = scmp.eq.s32.totalorder %s119, 0
      %s122 = sadd.s32 %s121, 1
      %s123 = scalar_select %p120, %s121, %s122
      %p126 = pneg %p120
      %p127 = scmp.eq.s32.totalorder %s25, 1
      %p128 = por %p126, %p127
      %p129 = scmp.ne.s32.totalorder %s121, %s124
      %p130 = scmp.eq.s32.totalorder %s25, 0
      %p131 = por %p129, %p130
      %p132 = scmp.ne.s32.totalorder %s121, %s124
      %p133 = scmp.eq.s32.totalorder %s30, 1
      %p134 = por %p132, %p133
      %p135 = scmp.ne.s32.totalorder %s124, %s125
      %p136 = scmp.eq.s32.totalorder %s30, 0
      %p137 = por %p135, %p136
      %p138 = scmp.ne.s32.totalorder %s124, %s125
      %p139 = scmp.eq.s32.totalorder %s31, 1
      %p140 = por %p138, %p139
      %p142 = scmp.ne.s32.totalorder %s125, %s141
      %p143 = scmp.eq.s32.totalorder %s31, 0
      %p144 = por %p142, %p143
      %s145 = sadd.s32 %s33, %s34
      %s146 = sadd.s32 %s47, %s43
      %s147 = ssub.s32 %s32, %s51
      %s148 = ssub.s32 %s145, %s146
      %s149 = sor.u32 %s147, %s148
      %p150 = scmp.eq.s32.totalorder %s149, 0
      %s152 = sadd.s32 %s151, 1
      %s153 = scalar_select %p150, %s151, %s152
      %p156 = pneg %p150
      %p157 = scmp.eq.s32.totalorder %s25, 1
      %p158 = por %p156, %p157
      %p159 = scmp.ne.s32.totalorder %s151, %s154
      %p160 = scmp.eq.s32.totalorder %s25, 0
      %p161 = por %p159, %p160
      %p162 = scmp.ne.s32.totalorder %s151, %s154
      %p163 = scmp.eq.s32.totalorder %s30, 1
      %p164 = por %p162, %p163
      %p165 = scmp.ne.s32.totalorder %s154, %s155
      %p166 = scmp.eq.s32.totalorder %s30, 0
      %p167 = por %p165, %p166
      %p168 = scmp.ne.s32.totalorder %s154, %s155
      %p169 = scmp.eq.s32.totalorder %s31, 1
      %p170 = por %p168, %p169
      %p172 = scmp.ne.s32.totalorder %s155, %s171
      %p173 = scmp.eq.s32.totalorder %s31, 0
      %p174 = por %p172, %p173
      %s175 = sadd.s32 %s33, %s34
      %s176 = sadd.s32 %s47, %s43
      %s177 = ssub.s32 %s32, %s51
      %s178 = ssub.s32 %s175, %s176
      %s179 = sor.u32 %s177, %s178
      %p180 = scmp.eq.s32.totalorder %s179, 0
      %s182 = sadd.s32 %s181, 1
      %s183 = scalar_select %p180, %s181, %s182
      %p186 = pneg %p180
      %p187 = scmp.eq.s32.totalorder %s25, 1
      %p188 = por %p186, %p187
      %p189 = scmp.ne.s32.totalorder %s181, %s184
      %p190 = scmp.eq.s32.totalorder %s25, 0
      %p191 = por %p189, %p190
      %p192 = scmp.ne.s32.totalorder %s181, %s184
      %p193 = scmp.eq.s32.totalorder %s30, 1
      %p194 = por %p192, %p193
      %p195 = scmp.ne.s32.totalorder %s184, %s185
      %p196 = scmp.eq.s32.totalorder %s30, 0
      %p197 = por %p195, %p196
      %p198 = scmp.ne.s32.totalorder %s184, %s185
      %p199 = scmp.eq.s32.totalorder %s31, 1
      %p200 = por %p198, %p199
      %p202 = scmp.ne.s32.totalorder %s185, %s201
      %p203 = scmp.eq.s32.totalorder %s31, 0
      %p204 = por %p202, %p203
      %s205 = ssub.s32 %s32, %s51
      %s206 = ssub.s32 %s33, %s47
      %s207 = sor.u32 %s205, %s206
      %p208 = scmp.eq.s32.totalorder %s207, 0
      %s210 = sadd.s32 %s209, 1
      %s211 = scalar_select %p208, %s209, %s210
      %p214 = pneg %p208
      %p215 = scmp.eq.s32.totalorder %s25, 1
      %p216 = por %p214, %p215
      %p217 = scmp.ne.s32.totalorder %s209, %s212
      %p218 = scmp.eq.s32.totalorder %s25, 0
      %p219 = por %p217, %p218
      %p220 = scmp.ne.s32.totalorder %s209, %s212
      %p221 = scmp.eq.s32.totalorder %s30, 1
      %p222 = por %p220, %p221
      %p223 = scmp.ne.s32.totalorder %s212, %s213
      %p224 = scmp.eq.s32.totalorder %s30, 0
      %p225 = por %p223, %p224
      %p226 = scmp.ne.s32.totalorder %s212, %s213
      %p227 = scmp.eq.s32.totalorder %s31, 1
      %p228 = por %p226, %p227
      %p230 = scmp.ne.s32.totalorder %s213, %s229
      %p231 = scmp.eq.s32.totalorder %s31, 0
      %p232 = por %p230, %p231
      %s233 = ssub.s32 %s32, %s51
      %s234 = ssub.s32 %s33, %s47
      %s235 = sor.u32 %s233, %s234
      %p236 = scmp.eq.s32.totalorder %s235, 0
      %s238 = sadd.s32 %s237, 1
      %s239 = scalar_select %p236, %s237, %s238
      %p242 = pneg %p236
      %p243 = scmp.eq.s32.totalorder %s25, 1
      %p244 = por %p242, %p243
      %p245 = scmp.ne.s32.totalorder %s237, %s240
      %p246 = scmp.eq.s32.totalorder %s25, 0
      %p247 = por %p245, %p246
      %p248 = scmp.ne.s32.totalorder %s237, %s240
      %p249 = scmp.eq.s32.totalorder %s30, 1
      %p250 = por %p248, %p249
      %p251 = scmp.ne.s32.totalorder %s240, %s241
      %p252 = scmp.eq.s32.totalorder %s30, 0
      %p253 = por %p251, %p252
      %p254 = scmp.ne.s32.totalorder %s240, %s241
      %p255 = scmp.eq.s32.totalorder %s31, 1
      %p256 = por %p254, %p255
      %p258 = scmp.ne.s32.totalorder %s241, %s257
      %p259 = scmp.eq.s32.totalorder %s31, 0
      %p260 = por %p258, %p259
      %p261 = scmp.le.s32.totalorder 1, %s25
      %p262 = scmp.lt.s32.totalorder %s25, 3
      %p263 = pnand %p261, %p262
      %p264 = pneg %p263
      // Predicated region
      $region9: #{tpu_custom_call.1} parent=5 // pred_check
        _
      $region10: #{tpu_custom_call.1} parent=5 // pred_check_branch
        %266 = sbr.rel (%p263) target = $region12
      $region11: #{tpu_custom_call.1} parent=5 // pred_region
        %s267 = ssub.s32 %s25, 1
        // Predicated region
        $region13: #{tpu_custom_call.1} parent=11 // pred_check
          %p268 = pneg %p65
        $region14: #{tpu_custom_call.1} parent=11 // pred_check_branch
          %270 = sbr.rel (%p268) target = $region16
        $region15: #{tpu_custom_call.1} parent=11 // pred_region
          %s272 = ssub.s32 16, 16
          %273 = vsyncadd [#allocation3], %s272
          %s275 = sshll.u32 [#allocation2], 4
          %s276 = int_to_ptr.vmem [resolvable:$true] %s275
          %278 = dma.hbm_to_vmem [thread:$0]  %s0, 16, %s276, [#allocation3]
        $region16: #{tpu_custom_call.1} parent=11 // pred_fallthru
          _
        // Predicated region
        $region17: #{tpu_custom_call.1} parent=11 // pred_check
          %p279 = pneg %p86
        $region18: #{tpu_custom_call.1} parent=11 // pred_check_branch
          %281 = sbr.rel (%p279) target = $region20
        $region19: #{tpu_custom_call.1} parent=11 // pred_region
          %s283 = ssub.s32 512, 512
          %284 = vsyncadd [#allocation6], %s283
          %s285 = sshll.u32 [#allocation5], 4
          %s286 = int_to_ptr.vmem [resolvable:$true] %s285
          %291 = dma.hbm_to_vmem [thread:$0]  %s1, 512, %s286, [#allocation6], 128, 128, 8
        $region20: #{tpu_custom_call.1} parent=11 // pred_fallthru
          _
        // Predicated region
        $region21: #{tpu_custom_call.1} parent=11 // pred_check
          %p292 = pneg %p107
        $region22: #{tpu_custom_call.1} parent=11 // pred_check_branch
          %294 = sbr.rel (%p292) target = $region24
        $region23: #{tpu_custom_call.1} parent=11 // pred_region
          %s296 = ssub.s32 640, 640
          %297 = vsyncadd [#allocation6], %s296
          %s298 = sshll.u32 [#allocation7], 4
          %s299 = int_to_ptr.vmem [resolvable:$true] %s298
          %304 = dma.hbm_to_vmem [thread:$0]  %s2, 640, %s299, [#allocation6], 128, 128, 8
        $region24: #{tpu_custom_call.1} parent=11 // pred_fallthru
          _
      $region12: #{tpu_custom_call.1} parent=5 // pred_fallthru
        _
      %p305 = scmp.lt.s32.totalorder %s25, 2
      // Predicated region
      $region25: #{tpu_custom_call.1} parent=5 // pred_check
        %p306 = pneg %p305
      $region26: #{tpu_custom_call.1} parent=5 // pred_check_branch
        %308 = sbr.rel (%p306) target = $region28
      $region27: #{tpu_custom_call.1} parent=5 // pred_region
        // Predicated region
        $region29: #{tpu_custom_call.1} parent=27 // pred_check
          %p309 = pneg %p131
        $region30: #{tpu_custom_call.1} parent=27 // pred_check_branch
          %311 = sbr.rel (%p309) target = $region32
        $region31: #{tpu_custom_call.1} parent=27 // pred_region
          %s312 = sand.u32 %s121, 1
          %s313 = scalar_lea.sflag [#allocation9], %s312
          %s314 = sand.u32 %s121, 1
          %s315 = smul.addr %s314, 8
          %s316 = scalar_lea.vmem [#allocation8], %s315
          %s317 = sadd.s32 %s33, %s34
          %s319 = ssub.s32 128, 128
          %320 = vsyncadd %s313, %s319
          %s321 = sadd.s32 %s317, %s32
          %s322 = smul.addr %s321, 128
          %s323 = scalar_lea.hbm %s3, %s322
          %s325 = sshll.u32 %s316, 4
          %s326 = int_to_ptr.vmem [resolvable:$true] %s325
          %328 = dma.hbm_to_vmem [thread:$0]  %s323, 128, %s326, %s313
        $region32: #{tpu_custom_call.1} parent=27 // pred_fallthru
          _
      $region28: #{tpu_custom_call.1} parent=5 // pred_fallthru
        _
      %p329 = scmp.le.s32.totalorder 1, %s25
      %p330 = scmp.lt.s32.totalorder %s25, 3
      %p331 = pnand %p329, %p330
      %p332 = pneg %p331
      // Predicated region
      $region33: #{tpu_custom_call.1} parent=5 // pred_check
        _
      $region34: #{tpu_custom_call.1} parent=5 // pred_check_branch
        %334 = sbr.rel (%p331) target = $region36
      $region35: #{tpu_custom_call.1} parent=5 // pred_region
        %s335 = ssub.s32 %s25, 1
        // Predicated region
        $region37: #{tpu_custom_call.1} parent=35 // pred_check
          %p336 = pneg %p65
        $region38: #{tpu_custom_call.1} parent=35 // pred_check_branch
          %338 = sbr.rel (%p336) target = $region40
        $region39: #{tpu_custom_call.1} parent=35 // pred_region
          %339 = dma.done [#allocation3], 16
        $region40: #{tpu_custom_call.1} parent=35 // pred_fallthru
          _
        // Predicated region
        $region41: #{tpu_custom_call.1} parent=35 // pred_check
          %p340 = pneg %p86
        $region42: #{tpu_custom_call.1} parent=35 // pred_check_branch
          %342 = sbr.rel (%p340) target = $region44
        $region43: #{tpu_custom_call.1} parent=35 // pred_region
          %343 = dma.done [#allocation6], 512
        $region44: #{tpu_custom_call.1} parent=35 // pred_fallthru
          _
        // Predicated region
        $region45: #{tpu_custom_call.1} parent=35 // pred_check
          %p344 = pneg %p107
        $region46: #{tpu_custom_call.1} parent=35 // pred_check_branch
          %346 = sbr.rel (%p344) target = $region48
        $region47: #{tpu_custom_call.1} parent=35 // pred_region
          %347 = dma.done [#allocation6], 640
        $region48: #{tpu_custom_call.1} parent=35 // pred_fallthru
          _
        %s348 = sand.u32 %s124, 1
        %s349 = scalar_lea.sflag [#allocation9], %s348
        %s350 = sand.u32 %s124, 1
        %s351 = smul.addr %s350, 8
        %s352 = scalar_lea.vmem [#allocation8], %s351
        // Predicated region
        $region49: #{tpu_custom_call.1} parent=35 // pred_check
          %p353 = pneg %p137
        $region50: #{tpu_custom_call.1} parent=35 // pred_check_branch
          %355 = sbr.rel (%p353) target = $region52
        $region51: #{tpu_custom_call.1} parent=35 // pred_region
          %356 = dma.done %s349, 128
        $region52: #{tpu_custom_call.1} parent=35 // pred_fallthru
          _
        %p357 = pneg %p65
        %p358 = pneg %p62
        %p359 = pneg %p86
        %p360 = pneg %p83
        %p361 = pneg %p107
        %p362 = pneg %p104
        %s363 = sand.u32 %s124, 1
        %s364 = scalar_lea.sflag [#allocation9], %s363
        %s365 = sand.u32 %s124, 1
        %s366 = smul.addr %s365, 8
        %s367 = scalar_lea.vmem [#allocation8], %s366
        %p368 = pneg %p137
        %p369 = pneg %p134
        %p370 = pneg %p167
        %p371 = pneg %p164
        %s372 = sadd.s32 %s36, %s37
        %p373 = scmp.lt.s32.totalorder %s35, 1
        %s374 = scalar_select %p373, %s35, 1
        %p375 = scmp.lt.s32.totalorder %s372, 0
        %s376 = scalar_select %p375, %s372, 0
        %s377 = smul.addr %s374, 4
        %s378 = sadd.s32 %s376, %s377
        %s379 = smul.addr %s378, 8
        %s380 = scalar_lea.vmem %s4, %s379
        %p381 = pneg %p197
        %p382 = pneg %p194
        %s383 = sand.u32 %s184, 1
        %s384 = scalar_lea.sflag [#allocation4], %s383
        %s385 = sand.u32 %s184, 1
        %s386 = scalar_lea.vmem [#allocation10], %s385
        %p387 = pneg %p225
        %p388 = pneg %p222
        %s389 = sand.u32 %s212, 1
        %s390 = scalar_lea.sflag [#allocation12], %s389
        %s391 = sand.u32 %s212, 1
        %s392 = scalar_lea.vmem [#allocation11], %s391
        %p393 = pneg %p253
        %p394 = pneg %p250
        %p395 = scmp.lt.s32.totalorder %s35, 1
        %s396 = scalar_select %p395, %s35, 1
        %p397 = scmp.lt.s32.totalorder %s36, 0
        %s398 = scalar_select %p397, %s36, 0
        %s399 = sadd.s32 %s398, %s396
        %s400 = scalar_lea.vmem %s7, %s399
        %s401 = sadd.s32 %s36, %s37
        %s402 = sadd.s32 %s36, %s37
        %p403 = scmp.lt.s32.totalorder %s35, 1
        %s404 = scalar_select %p403, %s35, 1
        %p405 = scmp.lt.s32.totalorder %s402, 0
        %s406 = scalar_select %p405, %s402, 0
        %s407 = smul.addr %s404, 4
        %s408 = sadd.s32 %s406, %s407
        %s409 = smul.addr %s408, 8
        %s410 = scalar_lea.vmem %s4, %s409
        %s411 = sadd.s32 %s36, %s37
        %s412 = sadd.s32 %s36, %s37
        %p413 = scmp.lt.s32.totalorder %s35, 1
        %s414 = scalar_select %p413, %s35, 1
        %p415 = scmp.lt.s32.totalorder %s36, 0
        %s416 = scalar_select %p415, %s36, 0
        %s417 = sadd.s32 %s416, %s414
        %s418 = scalar_lea.vmem %s7, %s417
        %v419 = vld [vmem:[%s352] sm:$0xff]
        %v420 = vld [vmem:[#allocation5] sm:$0xff]
        %v421 = vld [vmem:[#allocation5 + $0x8] sm:$0xff]
        %v422 = vld [vmem:[#allocation5 + $0x10] sm:$0xff]
        %v423 = vld [vmem:[#allocation5 + $0x18] sm:$0xff]
        %vm424 = vcmask 261120
        %v426 = vsel %vm424, %v419, 0
        %428 = vmatprep.subr.mxu0 0.0
        %429 = vmatpush1.msra.mxu0 0.0
        %430 = vmatprep.subr.mxu0 0.0
        %431 = vmatpush1.msra.mxu0 0.0
        %432 = vmatprep.subr.mxu0 0.0
        %433 = vmatpush1.msra.mxu0 0.0
        %434 = vmatprep.subr.mxu0 0.0
        %435 = vmatpush1.msra.mxu0 0.0
        %436 = vmatprep.subr.mxu0 0.0
        %437 = vmatpush1.msra.mxu0 0.0
        %438 = vmatprep.subr.mxu0 0.0
        %439 = vmatpush1.msra.mxu0 0.0
        %440 = vmatprep.subr.mxu0 0.0
        %441 = vmatpush1.msra.mxu0 0.0
        %442 = vmatprep.subr.mxu0 0.0
        %443 = vmatpush1.msra.mxu0 0.0
        %444 = vmatprep.subr.mxu0 0.0
        %445 = vmatpush1.msra.mxu0 0.0
        %446 = vmatprep.subr.mxu0 0.0
        %447 = vmatpush1.msra.mxu0 0.0
        %448 = vmatprep.subr.mxu0 0.0
        %449 = vmatpush1.msra.mxu0 0.0
        %450 = vmatprep.subr.mxu0 0.0
        %451 = vmatpush1.msra.mxu0 0.0
        %452 = vmatprep.subr.mxu0 0.0
        %453 = vmatpush1.msra.mxu0 %v423
        %454 = vmatprep.subr.mxu0 0.0
        %455 = vmatpush1.msra.mxu0 %v422
        %456 = vmatprep.subr.mxu0 0.0
        %457 = vmatpush1.msra.mxu0 %v421
        %458 = vmatprep.subr.mxu0 0.0
        %459 = vmatpush1.msra.mxu0 %v420
        %460 = vmatprep.subr.mxu0 0.0
        %461 = vmatpush2.msra.mxu0 0.0
        %462 = vmatprep.subr.mxu0 0.0
        %463 = vmatpush2.msra.mxu0 0.0
        %464 = vmatprep.subr.mxu0 0.0
        %465 = vmatpush2.msra.mxu0 0.0
        %466 = vmatprep.subr.mxu0 0.0
        %467 = vmatpush2.msra.mxu0 0.0
        %468 = vmatprep.subr.mxu0 0.0
        %469 = vmatpush2.msra.mxu0 0.0
        %470 = vmatprep.subr.mxu0 0.0
        %471 = vmatpush2.msra.mxu0 0.0
        %472 = vmatprep.subr.mxu0 0.0
        %473 = vmatpush2.msra.mxu0 0.0
        %474 = vmatprep.subr.mxu0 0.0
        %475 = vmatpush2.msra.mxu0 0.0
        %476 = vmatprep.subr.mxu0 0.0
        %477 = vmatpush2.msra.mxu0 0.0
        %478 = vmatprep.subr.mxu0 0.0
        %479 = vmatpush2.msra.mxu0 0.0
        %480 = vmatprep.subr.mxu0 0.0
        %481 = vmatpush2.msra.mxu0 0.0
        %482 = vmatprep.subr.mxu0 0.0
        %483 = vmatpush2.msra.mxu0 0.0
        %484 = vmatprep.subr.mxu0 0.0
        %485 = vmatpush2.msra.mxu0 0.0
        %486 = vmatprep.subr.mxu0 0.0
        %487 = vmatpush2.msra.mxu0 0.0
        %488 = vmatprep.subr.mxu0 0.0
        %489 = vmatpush2.msra.mxu0 0.0
        %490 = vmatprep.subr.mxu0 0.0
        %491 = vmatpush2.msra.mxu0 0.0
        %492 = vmatprep.mubr.f32.mxu0 0.0
        %493 = vmatmul.mubr.f32.gmra.mxu0 %v426
        %v494 = vpop.f32.mrf.mxu0
        %v495 = vadd.f32 0.0, %v494
        %v496 = vpop.f32.mrf.mxu0
        %497 = vdwg.mxu0
        %v498 = vld [vmem:[#allocation2] sm:$0x1]
        %v500 = vlaneseq
        %v501 = vshrl.u32 %v500, 7
        %v502 = vsub.s32 0, %v501
        %v503 = vrot.slane %v498, %v502
        %v505 = vsub.f32 %v503, %v495
        %506 = vmin.xlane.f32.xlu0 %v505
        %v507 = vpop.xlane.xlu0 %506
        %v508 = vlaneseq
        %v509 = vand.u32 %v508, 127
        %vm510 = vcmp.eq.f32.partialorder %v505, %v507
        %v511 = vsel %vm510, %v509, 128
        %v512 = vand.u32 %v511, 65535
        %v513 = vshra.s32 %v511, 16
        %v514 = vcvt.s32.f32 %v512
        %v515 = vcvt.s32.f32 %v513
        %516 = vmin.xlane.f32.xlu0 %v515
        %v517 = vpop.xlane.xlu0 %516
        %vm518 = vcmp.eq.f32.partialorder %v515, %v517
        %v519 = vsel %vm518, %v514, inf
        %520 = vmin.xlane.f32.xlu0 %v519
        %v521 = vpop.xlane.xlu0 %520
        %v522 = vcvt.f32.s32 %v521
        %v523 = vcvt.f32.s32 %v517
        %v524 = vshll.u32 %v523, 16
        %v525 = vadd.s32 %v524, %v522
        %vm526 = vcmp.eq.s32.totalorder %v509, %v525
        %v527 = vsel %vm526, 1, 0
        %v528 = vcvt.s32.f32 %v527
        %v529 = vld [vmem:[#allocation7] sm:$0xff]
        %v530 = vld [vmem:[#allocation7 + $0x8] sm:$0xff]
        %v531 = vld [vmem:[#allocation7 + $0x10] sm:$0xff]
        %v532 = vld [vmem:[#allocation7 + $0x18] sm:$0xff]
        %v533 = vld [vmem:[#allocation7 + $0x20] sm:$0xff]
        %534 = vmatprep.subr.mxu0 0.0
        %535 = vmatpush1.xpose.msra.mxu0 0.0
        %536 = vmatprep.subr.mxu0 0.0
        %537 = vmatpush1.xpose.msra.mxu0 0.0
        %538 = vmatprep.subr.mxu0 0.0
        %539 = vmatpush1.xpose.msra.mxu0 0.0
        %540 = vmatprep.subr.mxu0 0.0
        %541 = vmatpush1.xpose.msra.mxu0 0.0
        %542 = vmatprep.subr.mxu0 0.0
        %543 = vmatpush1.xpose.msra.mxu0 0.0
        %544 = vmatprep.subr.mxu0 0.0
        %545 = vmatpush1.xpose.msra.mxu0 0.0
        %546 = vmatprep.subr.mxu0 0.0
        %547 = vmatpush1.xpose.msra.mxu0 0.0
        %548 = vmatprep.subr.mxu0 0.0
        %549 = vmatpush1.xpose.msra.mxu0 0.0
        %550 = vmatprep.subr.mxu0 0.0
        %551 = vmatpush1.xpose.msra.mxu0 0.0
        %552 = vmatprep.subr.mxu0 0.0
        %553 = vmatpush1.xpose.msra.mxu0 0.0
        %554 = vmatprep.subr.mxu0 0.0
        %555 = vmatpush1.xpose.msra.mxu0 0.0
        %556 = vmatprep.subr.mxu0 0.0
        %557 = vmatpush1.xpose.msra.mxu0 0.0
        %558 = vmatprep.subr.mxu0 0.0
        %559 = vmatpush1.xpose.msra.mxu0 0.0
        %560 = vmatprep.subr.mxu0 0.0
        %561 = vmatpush1.xpose.msra.mxu0 0.0
        %562 = vmatprep.subr.mxu0 0.0
        %563 = vmatpush1.xpose.msra.mxu0 0.0
        %564 = vmatprep.subr.mxu0 0.0
        %565 = vmatpush1.xpose.msra.mxu0 %v528
        %566 = vmatprep.subr.mxu0 0.0
        %567 = vmatpush2.xpose.msra.mxu0 0.0
        %568 = vmatprep.subr.mxu0 0.0
        %569 = vmatpush2.xpose.msra.mxu0 0.0
        %570 = vmatprep.subr.mxu0 0.0
        %571 = vmatpush2.xpose.msra.mxu0 0.0
        %572 = vmatprep.subr.mxu0 0.0
        %573 = vmatpush2.xpose.msra.mxu0 0.0
        %574 = vmatprep.subr.mxu0 0.0
        %575 = vmatpush2.xpose.msra.mxu0 0.0
        %576 = vmatprep.subr.mxu0 0.0
        %577 = vmatpush2.xpose.msra.mxu0 0.0
        %578 = vmatprep.subr.mxu0 0.0
        %579 = vmatpush2.xpose.msra.mxu0 0.0
        %580 = vmatprep.subr.mxu0 0.0
        %581 = vmatpush2.xpose.msra.mxu0 0.0
        %582 = vmatprep.subr.mxu0 0.0
        %583 = vmatpush2.xpose.msra.mxu0 0.0
        %584 = vmatprep.subr.mxu0 0.0
        %585 = vmatpush2.xpose.msra.mxu0 0.0
        %586 = vmatprep.subr.mxu0 0.0
        %587 = vmatpush2.xpose.msra.mxu0 0.0
        %588 = vmatprep.subr.mxu0 0.0
        %589 = vmatpush2.xpose.msra.mxu0 0.0
        %590 = vmatprep.subr.mxu0 0.0
        %591 = vmatpush2.xpose.msra.mxu0 0.0
        %592 = vmatprep.subr.mxu0 0.0
        %593 = vmatpush2.xpose.msra.mxu0 0.0
        %594 = vmatprep.subr.mxu0 0.0
        %595 = vmatpush2.xpose.msra.mxu0 0.0
        %596 = vmatprep.subr.mxu0 0.0
        %597 = vmatpush2.xpose.msra.mxu0 0.0
        %598 = vmatprep.mubr.f32.mxu0 0.0
        %599 = vmatmul.mubr.f32.gmra.mxu0 %v529
        %v600 = vpop.f32.mrf.mxu0
        %v601 = vadd.f32 0.0, %v600
        %v602 = vpop.f32.mrf.mxu0
        %603 = vmatprep.mubr.f32.mxu0 0.0
        %604 = vmatmul.mubr.f32.gmra.mxu0 %v530
        %v605 = vpop.f32.mrf.mxu0
        %v606 = vadd.f32 0.0, %v605
        %v607 = vpop.f32.mrf.mxu0
        %608 = vmatprep.mubr.f32.mxu0 0.0
        %609 = vmatmul.mubr.f32.gmra.mxu0 %v531
        %v610 = vpop.f32.mrf.mxu0
        %v611 = vadd.f32 0.0, %v610
        %v612 = vpop.f32.mrf.mxu0
        %613 = vmatprep.mubr.f32.mxu0 0.0
        %614 = vmatmul.mubr.f32.gmra.mxu0 %v532
        %v615 = vpop.f32.mrf.mxu0
        %v616 = vadd.f32 0.0, %v615
        %v617 = vpop.f32.mrf.mxu0
        %618 = vmatprep.mubr.f32.mxu0 0.0
        %619 = vmatmul.mubr.f32.gmra.mxu0 %v533
        %v620 = vpop.f32.mrf.mxu0
        %v621 = vadd.f32 0.0, %v620
        %v622 = vpop.f32.mrf.mxu0
        %623 = vdwg.mxu0
        %vm624 = vcmask 64512
        %625 = vst.msk [vmem:[%s410] sm:$0xff] %vm624, %v601
        %626 = vst.msk [vmem:[%s410 + $0x8] sm:$0xff] %vm624, %v606
        %627 = vst.msk [vmem:[%s410 + $0x10] sm:$0xff] %vm624, %v611
        %628 = vst.msk [vmem:[%s410 + $0x18] sm:$0xff] %vm624, %v616
        %v629 = vcvt.f32.s32.ties.to.even %v621
        %vm630 = vcmask 57344
        %631 = vst.msk [vmem:[%s386] sm:$0x1] %vm630, %v629
        %p632 = scmp.eq.s32.totalorder %s37, 0
        // Predicated region
        $region53: #{tpu_custom_call.1} parent=35 // pred_check
          %p633 = pneg %p632
        $region54: #{tpu_custom_call.1} parent=35 // pred_check_branch
          %635 = sbr.rel (%p633) target = $region56
        $region55: #{tpu_custom_call.1} parent=35 // pred_region
          %636 = vst [vmem:[%s392] sm:$0x1] 0.0
          %vm637 = vcmask 0
          %638 = vst.msk [vmem:[%s418] sm:$0x1] %vm637, 0.0
        $region56: #{tpu_custom_call.1} parent=35 // pred_fallthru
          _
        %v639 = vld [vmem:[%s392] sm:$0x1]
        %v640 = vrot.slane %v528, 4
        %v641 = vadd.f32 %v528, %v640
        %v642 = vrot.slane %v641, 2
        %v643 = vadd.f32 %v641, %v642
        %v644 = vrot.slane %v643, 1
        %v645 = vadd.f32 %v643, %v644
        %v646 = vadd.f32 %v639, %v645
        %647 = vst [vmem:[%s392] sm:$0x1] %v646
        %v648 = vmul.f32 %v419, %v419
        %v649 = vsel %vm424, %v648, 0.0
        %650 = vadd.xlane.f32.xlu0 %v649
        %v651 = vpop.xlane.xlu0 %650
        %v652 = vmul.f32 %v507, 2.0
        %v653 = vadd.f32 %v651, %v652
        %v654 = vmax.f32 %v653, 0.0
        %v655 = vld [vmem:[%s418] sm:$0x1]
        %v656 = vrot.slane %v654, 4
        %v657 = vadd.f32 %v654, %v656
        %v658 = vrot.slane %v657, 2
        %v659 = vadd.f32 %v657, %v658
        %v660 = vrot.slane %v659, 1
        %v661 = vadd.f32 %v659, %v660
        %v662 = vadd.f32 %v655, %v661
        %vm663 = vcmask 0
        %664 = vst.msk [vmem:[%s418] sm:$0x1] %vm663, %v662
        %s665 = sadd.s32 %s36, %s37
        %p666 = scmp.lt.s32.totalorder %s35, 1
        %s667 = scalar_select %p666, %s35, 1
        %p668 = scmp.lt.s32.totalorder %s665, 0
        %s669 = scalar_select %p668, %s665, 0
        %s670 = smul.addr %s667, 4
        %s671 = sadd.s32 %s669, %s670
        %s672 = smul.addr %s671, 8
        %s673 = scalar_lea.vmem %s4, %s672
        %s674 = sand.u32 %s184, 1
        %s675 = scalar_lea.sflag [#allocation4], %s674
        %s676 = sand.u32 %s184, 1
        %s677 = scalar_lea.vmem [#allocation10], %s676
        %s678 = sand.u32 %s212, 1
        %s679 = scalar_lea.sflag [#allocation12], %s678
        %s680 = sand.u32 %s212, 1
        %s681 = scalar_lea.vmem [#allocation11], %s680
        %p682 = scmp.lt.s32.totalorder %s35, 1
        %s683 = scalar_select %p682, %s35, 1
        %p684 = scmp.lt.s32.totalorder %s36, 0
        %s685 = scalar_select %p684, %s36, 0
        %s686 = sadd.s32 %s685, %s683
        %s687 = scalar_lea.vmem %s7, %s686
        // Predicated region
        $region57: #{tpu_custom_call.1} parent=35 // pred_check
          %p688 = pneg %p164
        $region58: #{tpu_custom_call.1} parent=35 // pred_check_branch
          %690 = sbr.rel (%p688) target = $region60
        $region59: #{tpu_custom_call.1} parent=35 // pred_region
          %s691 = sadd.s32 %s36, %s37
        $region60: #{tpu_custom_call.1} parent=35 // pred_fallthru
          _
        // Predicated region
        $region61: #{tpu_custom_call.1} parent=35 // pred_check
          %p692 = pneg %p194
        $region62: #{tpu_custom_call.1} parent=35 // pred_check_branch
          %694 = sbr.rel (%p692) target = $region64
        $region63: #{tpu_custom_call.1} parent=35 // pred_region
          %s695 = sadd.s32 %s36, %s37
          %s697 = ssub.s32 16, 16
          %698 = vsyncadd %s675, %s697
          %s699 = sadd.s32 %s695, %s35
          %s700 = smul.addr %s699, 16
          %s701 = scalar_lea.hbm %s5, %s700
          %s703 = sshll.u32 %s677, 4
          %s704 = int_to_ptr.vmem [resolvable:$true] %s703
          %706 = dma.vmem_to_hbm [thread:$0]  %s704, 16, %s701, %s675
        $region64: #{tpu_custom_call.1} parent=35 // pred_fallthru
          _
        // Predicated region
        $region65: #{tpu_custom_call.1} parent=35 // pred_check
          %p707 = pneg %p222
        $region66: #{tpu_custom_call.1} parent=35 // pred_check_branch
          %709 = sbr.rel (%p707) target = $region68
        $region67: #{tpu_custom_call.1} parent=35 // pred_region
          %s711 = ssub.s32 16, 16
          %712 = vsyncadd %s679, %s711
          %s713 = sadd.s32 %s36, %s35
          %s714 = smul.addr %s713, 16
          %s715 = scalar_lea.hbm %s6, %s714
          %s717 = sshll.u32 %s681, 4
          %s718 = int_to_ptr.vmem [resolvable:$true] %s717
          %720 = dma.vmem_to_hbm [thread:$0]  %s718, 16, %s715, %s679
        $region68: #{tpu_custom_call.1} parent=35 // pred_fallthru
          _
        // Predicated region
        $region69: #{tpu_custom_call.1} parent=35 // pred_check
          %p721 = pneg %p250
        $region70: #{tpu_custom_call.1} parent=35 // pred_check_branch
          %723 = sbr.rel (%p721) target = $region72
        $region71: #{tpu_custom_call.1} parent=35 // pred_region
          _
        $region72: #{tpu_custom_call.1} parent=35 // pred_fallthru
          _
      $region36: #{tpu_custom_call.1} parent=5 // pred_fallthru
        _
      %p724 = scmp.le.s32.totalorder 2, %s25
      // Predicated region
      $region73: #{tpu_custom_call.1} parent=5 // pred_check
        %p725 = pneg %p724
      $region74: #{tpu_custom_call.1} parent=5 // pred_check_branch
        %727 = sbr.rel (%p725) target = $region76
      $region75: #{tpu_custom_call.1} parent=5 // pred_region
        %s728 = ssub.s32 %s25, 2
        // Predicated region
        $region77: #{tpu_custom_call.1} parent=75 // pred_check
          %p729 = pneg %p170
        $region78: #{tpu_custom_call.1} parent=75 // pred_check_branch
          %731 = sbr.rel (%p729) target = $region80
        $region79: #{tpu_custom_call.1} parent=75 // pred_region
          %s732 = sadd.s32 %s39, %s40
          %p733 = scmp.lt.s32.totalorder %s38, 1
          %s734 = scalar_select %p733, %s38, 1
          %p735 = scmp.lt.s32.totalorder %s732, 0
          %s736 = scalar_select %p735, %s732, 0
          %s737 = smul.addr %s734, 4
          %s738 = sadd.s32 %s736, %s737
          %s739 = smul.addr %s738, 8
          %s740 = scalar_lea.vmem %s4, %s739
        $region80: #{tpu_custom_call.1} parent=75 // pred_fallthru
          _
        // Predicated region
        $region81: #{tpu_custom_call.1} parent=75 // pred_check
          %p741 = pneg %p200
        $region82: #{tpu_custom_call.1} parent=75 // pred_check_branch
          %743 = sbr.rel (%p741) target = $region84
        $region83: #{tpu_custom_call.1} parent=75 // pred_region
          %s744 = sand.u32 %s185, 1
          %s745 = scalar_lea.sflag [#allocation4], %s744
          %s746 = sand.u32 %s185, 1
          %s747 = scalar_lea.vmem [#allocation10], %s746
          %748 = dma.done %s745, 16
        $region84: #{tpu_custom_call.1} parent=75 // pred_fallthru
          _
        // Predicated region
        $region85: #{tpu_custom_call.1} parent=75 // pred_check
          %p749 = pneg %p228
        $region86: #{tpu_custom_call.1} parent=75 // pred_check_branch
          %751 = sbr.rel (%p749) target = $region88
        $region87: #{tpu_custom_call.1} parent=75 // pred_region
          %s752 = sand.u32 %s213, 1
          %s753 = scalar_lea.sflag [#allocation12], %s752
          %s754 = sand.u32 %s213, 1
          %s755 = scalar_lea.vmem [#allocation11], %s754
          %756 = dma.done %s753, 16
        $region88: #{tpu_custom_call.1} parent=75 // pred_fallthru
          _
        // Predicated region
        $region89: #{tpu_custom_call.1} parent=75 // pred_check
          %p757 = pneg %p256
        $region90: #{tpu_custom_call.1} parent=75 // pred_check_branch
          %759 = sbr.rel (%p757) target = $region92
        $region91: #{tpu_custom_call.1} parent=75 // pred_region
          %p760 = scmp.lt.s32.totalorder %s38, 1
          %s761 = scalar_select %p760, %s38, 1
          %p762 = scmp.lt.s32.totalorder %s39, 0
          %s763 = scalar_select %p762, %s39, 0
          %s764 = sadd.s32 %s763, %s761
          %s765 = scalar_lea.vmem %s7, %s764
        $region92: #{tpu_custom_call.1} parent=75 // pred_fallthru
          _
      $region76: #{tpu_custom_call.1} parent=5 // pred_fallthru
        _
    $region6: #{tpu_custom_call.1} parent=1 // loop_footer
      %s29 = sadd.s32 1, %s25
    $region7: #{tpu_custom_call.1} parent=1 // loop_footer_branch
      %24 = sbr.rel target = $region3
    $region8: #{tpu_custom_call.1} parent=1 // loop_exit
      _
    %766 = vsyncpa [#allocation3], 1
    %s767 = scalar_lea.sflag [#allocation3], 1
    %768 = vsyncpa %s767, 1
    %769 = vsyncpa [#allocation6], 1
    %770 = vsyncpa [#allocation9], 1
    %s771 = scalar_lea.sflag [#allocation9], 1
    %772 = vsyncpa %s771, 1
    %773 = vsyncpa [#allocation4], 1
    %s774 = scalar_lea.sflag [#allocation4], 1
    %775 = vsyncpa %s774, 1
    %776 = vsyncpa [#allocation12], 1
    %s777 = scalar_lea.sflag [#allocation12], 1
    %778 = vsyncpa %s777, 1

</llo_original>
